<compile_context>
chip_gen: v7x
topology: tpu7x:2x2x1
jax: 0.10.0
libtpu: 0.0.40
codegen_flags: <defaults>
</compile_context>

<pallas_src>
import functools

import jax
import jax.numpy as jnp
from jax.experimental import pallas as pl
from jax.experimental.pallas import tpu as pltpu
import numpy as np

REP_DIM = 50          # each representation width
N_REP = 5             # phi_o, phi_mu0, phi_mu1, phi_w, phi_c
REP_PAD = 256         # lane-padded fused rep width (5 x 50 + zeros)
HID_DIM = 100         # head hidden width
N_HEAD = 3            # out0, out1, prop
HID_PAD = 384         # 3 x 128 lanes
OUT_DIM = 1
OUT_PAD = 128         # lane-dense output slab; cols 0/1/2 used


def _round_up(x, m):
    return ((x + m - 1) // m) * m


def _hypersnet_kernel(x_ref, wrep_ref, brep_ref, w1_ref, b1_ref, w2_ref, b2_ref, out_ref):
    x = x_ref[...]                                                    # (TB, F) bf16

    # Fused representation layer: one bf16 matmul (f32 acc) + one ReLU pass.
    h = jnp.dot(x, wrep_ref[...], preferred_element_type=jnp.float32) + brep_ref[...]
    h = jnp.maximum(h, 0.0)                                           # (TB, 256) f32

    # Fused head hidden layers: one bf16 matmul + one ReLU pass.
    h1 = jnp.dot(h.astype(jnp.bfloat16), w1_ref[...],
                 preferred_element_type=jnp.float32) + b1_ref[...]
    h1 = jnp.maximum(h1, 0.0)                                         # (TB, 384) f32

    # Fused output layers: one bf16 matmul, lane-dense bf16 store.
    o = jnp.dot(h1.astype(jnp.bfloat16), w2_ref[...],
                preferred_element_type=jnp.float32) + b2_ref[...]     # (TB, 128) f32

    # Sigmoid only on the propensity column (col 2); outcome heads stay linear.
    col = jax.lax.broadcasted_iota(jnp.int32, o.shape, 1)
    o = jnp.where(col == 2, jax.nn.sigmoid(o), o)
    out_ref[...] = o.astype(out_ref.dtype)


def pack_params(p, input_dim):
    """Host-side fusion of the 22 raw tensors into 6 padded, lane-dense tensors.

    Matmul operands are packed in bf16 (MXU-native on v5e/v6e/v7x); biases stay f32.
    """
    w_rep = np.zeros((input_dim, REP_PAD), np.float32)      # no K padding of X
    b_rep = np.zeros((1, REP_PAD), np.float32)
    rep_names = ("o", "0", "1", "w", "c")                   # column blocks 0..4
    for idx, name in enumerate(rep_names):
        c0 = idx * REP_DIM
        w_rep[:, c0:c0 + REP_DIM] = np.asarray(p[f"w{name}"])
        b_rep[:, c0:c0 + REP_DIM] = np.asarray(p[f"b{name}"])

    # Which rep blocks (by row offset in the fused H) feed each head, in the
    # same order the original torch.cat concatenates them.
    head_rows = {
        "h0": (0 * REP_DIM, 1 * REP_DIM, 4 * REP_DIM),   # h_o, h_mu0, h_c
        "h1": (0 * REP_DIM, 2 * REP_DIM, 4 * REP_DIM),   # h_o, h_mu1, h_c
        "hp": (3 * REP_DIM, 4 * REP_DIM),                # h_w, h_c
    }
    w1_all = np.zeros((REP_PAD, HID_PAD), np.float32)
    b1_all = np.zeros((1, HID_PAD), np.float32)
    w2_all = np.zeros((HID_PAD, OUT_PAD), np.float32)
    b2_all = np.zeros((1, OUT_PAD), np.float32)
    for hidx, tag in enumerate(("h0", "h1", "hp")):
        w1 = np.asarray(p[f"{tag}_w1"])                  # (head_in, 100)
        c0 = hidx * HID_DIM
        off = 0
        for row_start in head_rows[tag]:
            w1_all[row_start:row_start + REP_DIM, c0:c0 + HID_DIM] = w1[off:off + REP_DIM, :]
            off += REP_DIM
        b1_all[:, c0:c0 + HID_DIM] = np.asarray(p[f"{tag}_b1"])
        w2_all[c0:c0 + HID_DIM, hidx:hidx + 1] = np.asarray(p[f"{tag}_w2"])
        b2_all[:, hidx:hidx + 1] = np.asarray(p[f"{tag}_b2"])

    bf = jnp.bfloat16
    return {
        "w_rep": jnp.asarray(w_rep, dtype=bf), "b_rep": jnp.asarray(b_rep),
        "w1_all": jnp.asarray(w1_all, dtype=bf), "b1_all": jnp.asarray(b1_all),
        "w2_all": jnp.asarray(w2_all, dtype=bf), "b2_all": jnp.asarray(b2_all),
    }


def _choose_batch_tile(B):
    # Small batches: one tile (latency bound anyway).
    if B <= 256:
        return _round_up(B, 8)
    # Large batches: big tiles to amortize ~0.35us/grid-step, but keep at least
    # 2 grid steps so the "parallel" axis shards across v7x's 2 TensorCores.
    TB = 1024
    while TB > 256 and _round_up(B, TB) < 2 * TB:
        TB //= 2
    return TB


@functools.partial(jax.jit, static_argnames=())
def hypersnet_forward(x, packed):
    B, F = x.shape
    TB = _choose_batch_tile(B)
    b_pad = _round_up(B, TB)

    x_b = x.astype(jnp.bfloat16)
    if b_pad != B:
        x_b = jnp.pad(x_b, ((0, b_pad - B), (0, 0)))
    grid = (b_pad // TB,)

    def wspec(shape):
        # Weights/biases stay VMEM-resident across grid steps (constant index_map).
        return pl.BlockSpec(shape, lambda i: (0, 0))

    out = pl.pallas_call(
        _hypersnet_kernel,
        out_shape=jax.ShapeDtypeStruct((b_pad, OUT_PAD), jnp.bfloat16),
        grid=grid,
        in_specs=[
            pl.BlockSpec((TB, F), lambda i: (i, 0)),      # X, tiled over batch; full-extent F
            wspec((F, REP_PAD)),
            wspec((1, REP_PAD)),
            wspec((REP_PAD, HID_PAD)),
            wspec((1, HID_PAD)),
            wspec((HID_PAD, OUT_PAD)),
            wspec((1, OUT_PAD)),
        ],
        out_specs=pl.BlockSpec((TB, OUT_PAD), lambda i: (i, 0)),
        compiler_params=pltpu.CompilerParams(dimension_semantics=("parallel",)),
    )(x_b, packed["w_rep"], packed["b_rep"], packed["w1_all"], packed["b1_all"],
      packed["w2_all"], packed["b2_all"])

    out = out[:B].astype(jnp.float32)
    return out[:, 0:1], out[:, 1:2], out[:, 2:3]


def make_params(key, input_dim):
    """Deterministic synthetic parameters (no checkpoint loading), raw layout."""
    keys = jax.random.split(key, 16)
    ki = iter(keys)

    def lin(k, fan_in, fan_out):
        w = jax.random.normal(k, (fan_in, fan_out), jnp.float32) * (1.0 / np.sqrt(fan_in))
        b = jnp.zeros((1, fan_out), jnp.float32)
        return w, b

    p = {}
    for name in ("o", "0", "1", "w", "c"):
        w, b = lin(next(ki), input_dim, REP_DIM)
        p[f"w{name}"], p[f"b{name}"] = w, b

    # Hypernetwork-produced head weights: emulate a flat weight vector per head
    # (target_in=150, target_layers=[100,1]) and reshape MLPFunctional-style
    # with the *actual* in_size used at the call site (150, 150, 100).
    flat_len = 150 * HID_DIM + HID_DIM + HID_DIM * OUT_DIM + OUT_DIM
    for tag, in_size in (("h0", 3 * REP_DIM), ("h1", 3 * REP_DIM), ("hp", 2 * REP_DIM)):
        flat = jax.random.normal(next(ki), (flat_len,), jnp.float32) * 0.05
        idx = 0
        w1 = flat[idx: idx + in_size * HID_DIM].reshape(HID_DIM, in_size)  # (out,in) like nn.Linear
        idx += in_size * HID_DIM
        b1 = flat[idx: idx + HID_DIM]
        idx += HID_DIM
        w2 = flat[idx: idx + HID_DIM * OUT_DIM].reshape(OUT_DIM, HID_DIM)
        idx += HID_DIM * OUT_DIM
        b2 = flat[idx: idx + OUT_DIM]
        p[f"{tag}_w1"] = w1.T                      # (in, 100)
        p[f"{tag}_b1"] = b1.reshape(1, HID_DIM)
        p[f"{tag}_w2"] = w2.T                      # (100, 1)
        p[f"{tag}_b2"] = b2.reshape(1, OUT_DIM)
    return p


def reference_forward(x, p):
    """Pure-JAX f32 reference of the same forward pass (eval mode), raw layout."""
    def rep(w, b):
        return jax.nn.relu(x @ w + b)

    h_o, h_m0, h_m1, h_w, h_c = (
        rep(p["wo"], p["bo"]), rep(p["w0"], p["b0"]), rep(p["w1"], p["b1"]),
        rep(p["ww"], p["bw"]), rep(p["wc"], p["bc"]),
    )

    def head(z, w1, b1, w2, b2, sig):
        h = jax.nn.relu(z @ w1 + b1)
        o = h @ w2 + b2
        return jax.nn.sigmoid(o) if sig else o

    out0 = head(jnp.concatenate([h_o, h_m0, h_c], axis=1),
                p["h0_w1"], p["h0_b1"], p["h0_w2"], p["h0_b2"], False)
    out1 = head(jnp.concatenate([h_o, h_m1, h_c], axis=1),
                p["h1_w1"], p["h1_b1"], p["h1_w2"], p["h1_b2"], False)
    prop = head(jnp.concatenate([h_w, h_c], axis=1),
                p["hp_w1"], p["hp_b1"], p["hp_w2"], p["hp_b2"], True)
    return out0, out1, prop


if __name__ == "__main__":
    key = jax.random.PRNGKey(0)
    k_x, k_p = jax.random.split(key)

    batch = 8
    input_dim = 25  # IHDP-style covariate dimension

    x = jax.random.normal(k_x, (batch, input_dim), jnp.float32)
    params = make_params(k_p, input_dim)
    packed = pack_params(params, input_dim)

    out0, out1, prop = hypersnet_forward(x, packed)
    jax.block_until_ready((out0, out1, prop))

    r0, r1, rp = reference_forward(x, params)
    assert out0.shape == (batch, 1) and out1.shape == (batch, 1) and prop.shape == (batch, 1)
    # bf16 MXU operands + bf16 output slab (f32 accumulation): relaxed tolerance vs f32 ref.
    np.testing.assert_allclose(np.asarray(out0), np.asarray(r0), rtol=2e-2, atol=2e-2)
    np.testing.assert_allclose(np.asarray(out1), np.asarray(r1), rtol=2e-2, atol=2e-2)
    np.testing.assert_allclose(np.asarray(prop), np.asarray(rp), rtol=2e-2, atol=2e-2)

    print("KERNEL_OK")
</pallas_src>

<mosaic_0001>
module attributes {stable_mosaic.version = 11 : i64} {
  func.func @_hypersnet_kernel(%arg0: i32, %arg1: memref<8x25xbf16, #tpu.memory_space<vmem>>, %arg2: memref<25x256xbf16, #tpu.memory_space<vmem>>, %arg3: memref<1x256xf32, #tpu.memory_space<vmem>>, %arg4: memref<256x384xbf16, #tpu.memory_space<vmem>>, %arg5: memref<1x384xf32, #tpu.memory_space<vmem>>, %arg6: memref<384x128xbf16, #tpu.memory_space<vmem>>, %arg7: memref<1x128xf32, #tpu.memory_space<vmem>>, %arg8: memref<8x128xbf16, #tpu.memory_space<vmem>>) attributes {dimension_semantics = [#tpu.dimension_semantics<parallel>], iteration_bounds = array<i64: 1>, scalar_prefetch = 0 : i64, scratch_operands = 0 : i64, tpu.core_type = #tpu.core_type<tc>, window_params = [{transform_indices = @transform_0, window_bounds = array<i64: 8, 25>}, {pipeline_mode = #tpu.pipeline_mode<synchronous>, transform_indices = @transform_1, window_bounds = array<i64: 25, 256>}, {pipeline_mode = #tpu.pipeline_mode<synchronous>, transform_indices = @transform_2, window_bounds = array<i64: 1, 256>}, {pipeline_mode = #tpu.pipeline_mode<synchronous>, transform_indices = @transform_3, window_bounds = array<i64: 256, 384>}, {pipeline_mode = #tpu.pipeline_mode<synchronous>, transform_indices = @transform_4, window_bounds = array<i64: 1, 384>}, {pipeline_mode = #tpu.pipeline_mode<synchronous>, transform_indices = @transform_5, window_bounds = array<i64: 384, 128>}, {pipeline_mode = #tpu.pipeline_mode<synchronous>, transform_indices = @transform_6, window_bounds = array<i64: 1, 128>}, {transform_indices = @transform_7, window_bounds = array<i64: 8, 128>}]} {
    %c0 = arith.constant 0 : index
    %c0_0 = arith.constant 0 : index
    %0 = vector.load %arg1[%c0, %c0_0] : memref<8x25xbf16, #tpu.memory_space<vmem>>, vector<8x25xbf16>
    %c0_1 = arith.constant 0 : index
    %c0_2 = arith.constant 0 : index
    %1 = vector.load %arg2[%c0_1, %c0_2] : memref<25x256xbf16, #tpu.memory_space<vmem>>, vector<25x256xbf16>
    %cst = arith.constant dense<0.000000e+00> : vector<8x256xf32>
    %2 = tpu.matmul %0, %1, %cst {dimension_numbers = #tpu.dot_dimension_numbers<[1], [0], [0], [1], [0, 0, 1, 1], [], []>} : vector<8x25xbf16>, vector<25x256xbf16>, vector<8x256xf32> -> vector<8x256xf32>
    %c0_3 = arith.constant 0 : index
    %c0_4 = arith.constant 0 : index
    %3 = vector.load %arg3[%c0_3, %c0_4] : memref<1x256xf32, #tpu.memory_space<vmem>>, vector<1x256xf32>
    %4 = vector.broadcast %3 : vector<1x256xf32> to vector<8x256xf32>
    %5 = arith.addf %2, %4 : vector<8x256xf32>
    %cst_5 = arith.constant 0.000000e+00 : f32
    %6 = vector.broadcast %cst_5 : f32 to vector<8x256xf32>
    %7 = arith.maximumf %5, %6 : vector<8x256xf32>
    %8 = arith.truncf %7 : vector<8x256xf32> to vector<8x256xbf16>
    %c0_6 = arith.constant 0 : index
    %c0_7 = arith.constant 0 : index
    %9 = vector.load %arg4[%c0_6, %c0_7] : memref<256x384xbf16, #tpu.memory_space<vmem>>, vector<256x384xbf16>
    %cst_8 = arith.constant dense<0.000000e+00> : vector<8x384xf32>
    %10 = tpu.matmul %8, %9, %cst_8 {dimension_numbers = #tpu.dot_dimension_numbers<[1], [0], [0], [1], [0, 0, 1, 1], [], []>} : vector<8x256xbf16>, vector<256x384xbf16>, vector<8x384xf32> -> vector<8x384xf32>
    %c0_9 = arith.constant 0 : index
    %c0_10 = arith.constant 0 : index
    %11 = vector.load %arg5[%c0_9, %c0_10] : memref<1x384xf32, #tpu.memory_space<vmem>>, vector<1x384xf32>
    %12 = vector.broadcast %11 : vector<1x384xf32> to vector<8x384xf32>
    %13 = arith.addf %10, %12 : vector<8x384xf32>
    %cst_11 = arith.constant 0.000000e+00 : f32
    %14 = vector.broadcast %cst_11 : f32 to vector<8x384xf32>
    %15 = arith.maximumf %13, %14 : vector<8x384xf32>
    %16 = arith.truncf %15 : vector<8x384xf32> to vector<8x384xbf16>
    %c0_12 = arith.constant 0 : index
    %c0_13 = arith.constant 0 : index
    %17 = vector.load %arg6[%c0_12, %c0_13] : memref<384x128xbf16, #tpu.memory_space<vmem>>, vector<384x128xbf16>
    %cst_14 = arith.constant dense<0.000000e+00> : vector<8x128xf32>
    %18 = tpu.matmul %16, %17, %cst_14 {dimension_numbers = #tpu.dot_dimension_numbers<[1], [0], [0], [1], [0, 0, 1, 1], [], []>} : vector<8x384xbf16>, vector<384x128xbf16>, vector<8x128xf32> -> vector<8x128xf32>
    %c0_15 = arith.constant 0 : index
    %c0_16 = arith.constant 0 : index
    %19 = vector.load %arg7[%c0_15, %c0_16] : memref<1x128xf32, #tpu.memory_space<vmem>>, vector<1x128xf32>
    %20 = vector.broadcast %19 : vector<1x128xf32> to vector<8x128xf32>
    %21 = arith.addf %18, %20 : vector<8x128xf32>
    %22 = tpu.iota {dimensions = array<i32: 1>} : vector<8x128xi32>
    %c2_i32 = arith.constant 2 : i32
    %23 = vector.broadcast %c2_i32 : i32 to vector<8x128xi32>
    %24 = arith.cmpi eq, %22, %23 : vector<8x128xi32>
    %25 = arith.negf %21 : vector<8x128xf32>
    %26 = math.exp %25 : vector<8x128xf32>
    %cst_17 = arith.constant 1.000000e+00 : f32
    %27 = vector.broadcast %cst_17 : f32 to vector<8x128xf32>
    %28 = arith.addf %27, %26 : vector<8x128xf32>
    %29 = arith.divf %27, %28 : vector<8x128xf32>
    %30 = arith.select %24, %29, %21 : vector<8x128xi1>, vector<8x128xf32>
    %31 = arith.truncf %30 : vector<8x128xf32> to vector<8x128xbf16>
    %c0_18 = arith.constant 0 : index
    %c0_19 = arith.constant 0 : index
    %32 = vector.load %arg8[%c0_18, %c0_19] : memref<8x128xbf16, #tpu.memory_space<vmem>>, vector<8x128xbf16>
    tpu.vector_store %arg8[%c0_18, %c0_19], %31 {strides = array<i32>} : memref<8x128xbf16, #tpu.memory_space<vmem>>, vector<8x128xbf16>,
    return
  }
  func.func @transform_0(%arg0: i32) -> (i32, i32) {
    %c0_i32 = arith.constant 0 : i32
    %c0_i32_0 = arith.constant 0 : i32
    return %arg0, %c0_i32 : i32, i32
  }
  func.func @transform_1(%arg0: i32) -> (i32, i32) {
    %c0_i32 = arith.constant 0 : i32
    %c0_i32_0 = arith.constant 0 : i32
    %c0_i32_1 = arith.constant 0 : i32
    return %c0_i32, %c0_i32_0 : i32, i32
  }
  func.func @transform_2(%arg0: i32) -> (i32, i32) {
    %c0_i32 = arith.constant 0 : i32
    %c0_i32_0 = arith.constant 0 : i32
    %c0_i32_1 = arith.constant 0 : i32
    return %c0_i32, %c0_i32_0 : i32, i32
  }
  func.func @transform_3(%arg0: i32) -> (i32, i32) {
    %c0_i32 = arith.constant 0 : i32
    %c0_i32_0 = arith.constant 0 : i32
    %c0_i32_1 = arith.constant 0 : i32
    return %c0_i32, %c0_i32_0 : i32, i32
  }
  func.func @transform_4(%arg0: i32) -> (i32, i32) {
    %c0_i32 = arith.constant 0 : i32
    %c0_i32_0 = arith.constant 0 : i32
    %c0_i32_1 = arith.constant 0 : i32
    return %c0_i32, %c0_i32_0 : i32, i32
  }
  func.func @transform_5(%arg0: i32) -> (i32, i32) {
    %c0_i32 = arith.constant 0 : i32
    %c0_i32_0 = arith.constant 0 : i32
    %c0_i32_1 = arith.constant 0 : i32
    return %c0_i32, %c0_i32_0 : i32, i32
  }
  func.func @transform_6(%arg0: i32) -> (i32, i32) {
    %c0_i32 = arith.constant 0 : i32
    %c0_i32_0 = arith.constant 0 : i32
    %c0_i32_1 = arith.constant 0 : i32
    return %c0_i32, %c0_i32_0 : i32, i32
  }
  func.func @transform_7(%arg0: i32) -> (i32, i32) {
    %c0_i32 = arith.constant 0 : i32
    %c0_i32_0 = arith.constant 0 : i32
    return %arg0, %c0_i32 : i32, i32
  }
}

</mosaic_0001>

<llo_original>
// kernel: hypersnet_forward.1
$region0: #{hypersnet_forward.1}
  #allocation0 [shape = 'u32[]', space=smem, size = 0x4, offset = 0x4, fixed_abs, tag = 'smem constant byte address 0x4 - core index']
  #allocation1 [shape = 'u32[144,128]{1,0:T(1,128)}', space=vmem, size = 0x12000, scoped, tag = 'internal scratch']
  %s0 = inlined_call_operand.vmem [shape: bf16[8,25], index: 0, kind: input, shape index: {}]
  %s1 = inlined_call_operand.vmem [shape: bf16[25,256], index: 1, kind: input, shape index: {}]
  %s2 = inlined_call_operand.vmem [shape: f32[1,256], index: 2, kind: input, shape index: {}]
  %s3 = inlined_call_operand.hbm [shape: bf16[256,384], index: 3, kind: input, shape index: {}]
  %s4 = inlined_call_operand.hbm [shape: f32[1,384], index: 4, kind: input, shape index: {}]
  %s5 = inlined_call_operand.hbm [shape: bf16[384,128], index: 5, kind: input, shape index: {}]
  %s6 = inlined_call_operand.hbm [shape: f32[1,128], index: 6, kind: input, shape index: {}]
  %s7 = inlined_call_operand.vmem [shape: bf16[8,128], index: 7, kind: output, shape index: {}]
  %s8 = sld [smem:[#allocation0]]
  $region54: #{hypersnet_forward.1} parent=0
    _
  %s10 = ssub.s32 1, %s8
  %s11 = scalar_select 0, %s10, %s8
  $region1: #{hypersnet_forward.1} parent=0
    #allocation2 [shape = 'u8[196608]{0}', space=vmem, size = 0x30000, scoped, tag = 'input window, operand 3, single buffered']
    #allocation3 [shape = 's32[1]{0}', space=sflag, size = 0x4, scoped, tag = 'scoped memory for hypersnet_forward.1']
    #allocation4 [shape = 'u8[1536]{0}', space=vmem, size = 0x800, scoped, tag = 'input window, operand 4, single buffered']
    #allocation5 [shape = 's32[1]{0}', space=sflag, size = 0x4, scoped, tag = 'scoped memory for hypersnet_forward.1']
    #allocation6 [shape = 'u8[98304]{0}', space=vmem, size = 0x18000, scoped, tag = 'input window, operand 5, single buffered']
    #allocation7 [shape = 'u8[512]{0}', space=vmem, size = 0x400, scoped, tag = 'input window, operand 6, single buffered']
    #allocation8 [shape = 's32[1]{0}', space=sflag, size = 0x4, scoped, tag = 'scoped memory for hypersnet_forward.1']
    %12 = vsyncpa [#allocation3], 0
    %13 = vsyncpa [#allocation5], 0
    %14 = vsyncpa [#allocation8], 0
    // Predicated region
    $region2: #{hypersnet_forward.1} parent=1 // pred_check
      _
    $region3: #{hypersnet_forward.1} parent=1 // pred_check_branch
      %16 = sbr.rel (0) target = $region5
    $region4: #{hypersnet_forward.1} parent=1 // pred_region
      _
    $region5: #{hypersnet_forward.1} parent=1 // pred_fallthru
      _
    // Predicated region
    $region6: #{hypersnet_forward.1} parent=1 // pred_check
      _
    $region7: #{hypersnet_forward.1} parent=1 // pred_check_branch
      %18 = sbr.rel (0) target = $region9
    $region8: #{hypersnet_forward.1} parent=1 // pred_region
      _
    $region9: #{hypersnet_forward.1} parent=1 // pred_fallthru
      _
    // Predicated region
    $region10: #{hypersnet_forward.1} parent=1 // pred_check
      _
    $region11: #{hypersnet_forward.1} parent=1 // pred_check_branch
      %20 = sbr.rel (0) target = $region13
    $region12: #{hypersnet_forward.1} parent=1 // pred_region
      _
    $region13: #{hypersnet_forward.1} parent=1 // pred_fallthru
      _
    // Predicated region
    $region14: #{hypersnet_forward.1} parent=1 // pred_check
      _
    $region15: #{hypersnet_forward.1} parent=1 // pred_check_branch
      %22 = sbr.rel (0) target = $region17
    $region16: #{hypersnet_forward.1} parent=1 // pred_region
      %s24 = ssub.s32 6144, 6144
      %25 = vsyncadd [#allocation3], %s24
      %s26 = sshll.u32 [#allocation2], 4
      %s27 = int_to_ptr.vmem [resolvable:$true] %s26
      %32 = dma.hbm_to_vmem [thread:$0]  %s3, 6144, %s27, [#allocation3], 192, 192, 12
    $region17: #{hypersnet_forward.1} parent=1 // pred_fallthru
      _
    // Predicated region
    $region18: #{hypersnet_forward.1} parent=1 // pred_check
      _
    $region19: #{hypersnet_forward.1} parent=1 // pred_check_branch
      %34 = sbr.rel (0) target = $region21
    $region20: #{hypersnet_forward.1} parent=1 // pred_region
      %s36 = ssub.s32 48, 48
      %37 = vsyncadd [#allocation5], %s36
      %s39 = sshll.u32 [#allocation4], 4
      %s40 = int_to_ptr.vmem [resolvable:$true] %s39
      %42 = dma.hbm_to_vmem [thread:$0]  %s4, 48, %s40, [#allocation5]
    $region21: #{hypersnet_forward.1} parent=1 // pred_fallthru
      _
    // Predicated region
    $region22: #{hypersnet_forward.1} parent=1 // pred_check
      _
    $region23: #{hypersnet_forward.1} parent=1 // pred_check_branch
      %44 = sbr.rel (0) target = $region25
    $region24: #{hypersnet_forward.1} parent=1 // pred_region
      %s46 = ssub.s32 3072, 3072
      %47 = vsyncadd [#allocation5], %s46
      %s48 = sshll.u32 [#allocation6], 4
      %s49 = int_to_ptr.vmem [resolvable:$true] %s48
      %54 = dma.hbm_to_vmem [thread:$0]  %s5, 3072, %s49, [#allocation5], 64, 64, 4
    $region25: #{hypersnet_forward.1} parent=1 // pred_fallthru
      _
    // Predicated region
    $region26: #{hypersnet_forward.1} parent=1 // pred_check
      _
    $region27: #{hypersnet_forward.1} parent=1 // pred_check_branch
      %56 = sbr.rel (0) target = $region29
    $region28: #{hypersnet_forward.1} parent=1 // pred_region
      %s58 = ssub.s32 16, 16
      %59 = vsyncadd [#allocation8], %s58
      %s61 = sshll.u32 [#allocation7], 4
      %s62 = int_to_ptr.vmem [resolvable:$true] %s61
      %64 = dma.hbm_to_vmem [thread:$0]  %s6, 16, %s62, [#allocation8]
    $region29: #{hypersnet_forward.1} parent=1 // pred_fallthru
      _
    // Predicated region
    $region30: #{hypersnet_forward.1} parent=1 // pred_check
      _
    $region31: #{hypersnet_forward.1} parent=1 // pred_check_branch
      %66 = sbr.rel (0) target = $region33
    $region32: #{hypersnet_forward.1} parent=1 // pred_region
      %67 = dma.done [#allocation3], 6144
    $region33: #{hypersnet_forward.1} parent=1 // pred_fallthru
      _
    // Predicated region
    $region34: #{hypersnet_forward.1} parent=1 // pred_check
      _
    $region35: #{hypersnet_forward.1} parent=1 // pred_check_branch
      %69 = sbr.rel (0) target = $region37
    $region36: #{hypersnet_forward.1} parent=1 // pred_region
      %70 = dma.done [#allocation5], 48
    $region37: #{hypersnet_forward.1} parent=1 // pred_fallthru
      _
    // Predicated region
    $region38: #{hypersnet_forward.1} parent=1 // pred_check
      _
    $region39: #{hypersnet_forward.1} parent=1 // pred_check_branch
      %72 = sbr.rel (0) target = $region41
    $region40: #{hypersnet_forward.1} parent=1 // pred_region
      %73 = dma.done [#allocation5], 3072
    $region41: #{hypersnet_forward.1} parent=1 // pred_fallthru
      _
    // Predicated region
    $region42: #{hypersnet_forward.1} parent=1 // pred_check
      _
    $region43: #{hypersnet_forward.1} parent=1 // pred_check_branch
      %75 = sbr.rel (0) target = $region45
    $region44: #{hypersnet_forward.1} parent=1 // pred_region
      %76 = dma.done [#allocation8], 16
    $region45: #{hypersnet_forward.1} parent=1 // pred_fallthru
      _
    %v78 = vld [vmem:[%s0] sm:$0xf]
    %v79 = vld [vmem:[%s1] sm:$0xff]
    %v80 = vld [vmem:[%s1 + $0x8] sm:$0xff]
    %v81 = vld [vmem:[%s1 + $0x10] sm:$0xff]
    %v82 = vld [vmem:[%s1 + $0x18] sm:$0x11]
    %v83 = vld [vmem:[%s2] sm:$0x3]
    %v85 = vlaneseq
    %v86 = vshrl.u32 %v85, 7
    %v87 = vsub.s32 0, %v86
    %v88 = vrot.slane %v83, %v87
    %v89 = vlaneseq
    %v90 = vshrl.u32 %v89, 7
    %v91 = vsub.s32 1, %v90
    %v92 = vrot.slane %v83, %v91
    %v99 = vunpack.c.l.b16 %v79
    %v100 = vunpack.c.h.b16 %v79
    %v101 = vunpack.c.l.b16 %v80
    %v102 = vunpack.c.h.b16 %v80
    %v103 = vunpack.c.l.b16 %v81
    %v104 = vunpack.c.h.b16 %v81
    %v105 = vunpack.c.l.b16 %v82
    %v106 = vunpack.c.h.b16 %v82
    %v107 = vpack.c.b16 %v101, %v99
    %v108 = vpack.c.b16 %v102, %v100
    %v109 = vpack.c.b16 %v105, %v103
    %v110 = vpack.c.b16 %v106, %v104
    %vm113 = vcmask 203776
    %v115 = vsel %vm113, %v78, 0
    %vm117 = vcmask 1043456
    %vm118 = vcmask 1044480
    %v119 = vsel %vm117, 4294967295, 65535
    %v120 = vsel %vm118, %v119, 0
    %v122 = vand.u32 %v109, %v120
    %v125 = vand.u32 %v110, %v120
    %127 = vmatprep.subr.bf16.mxu0 %v108
    %128 = vmatpush1.bf16.msra.mxu0 %v107
    %129 = vmatprep.subr.bf16.mxu0 %v125
    %130 = vmatpush1.bf16.msra.mxu0 %v122
    %131 = vmatprep.subr.bf16.mxu0 0
    %132 = vmatpush1.bf16.msra.mxu0 0
    %133 = vmatprep.subr.bf16.mxu0 0
    %134 = vmatpush1.bf16.msra.mxu0 0
    %135 = vmatprep.subr.bf16.mxu0 0
    %136 = vmatpush1.bf16.msra.mxu0 0
    %137 = vmatprep.subr.bf16.mxu0 0
    %138 = vmatpush1.bf16.msra.mxu0 0
    %139 = vmatprep.subr.bf16.mxu0 0
    %140 = vmatpush1.bf16.msra.mxu0 0
    %141 = vmatprep.subr.bf16.mxu0 0
    %142 = vmatpush1.bf16.msra.mxu0 0
    %143 = vmatprep.subr.bf16.mxu0 0
    %144 = vmatpush1.bf16.msra.mxu0 0
    %145 = vmatprep.subr.bf16.mxu0 0
    %146 = vmatpush1.bf16.msra.mxu0 0
    %147 = vmatprep.subr.bf16.mxu0 0
    %148 = vmatpush1.bf16.msra.mxu0 0
    %149 = vmatprep.subr.bf16.mxu0 0
    %150 = vmatpush1.bf16.msra.mxu0 0
    %151 = vmatprep.subr.bf16.mxu0 0
    %152 = vmatpush1.bf16.msra.mxu0 0
    %153 = vmatprep.subr.bf16.mxu0 0
    %154 = vmatpush1.bf16.msra.mxu0 0
    %155 = vmatprep.subr.bf16.mxu0 0
    %156 = vmatpush1.bf16.msra.mxu0 0
    %157 = vmatprep.subr.bf16.mxu0 0
    %158 = vmatpush1.bf16.msra.mxu0 0
    %159 = vmatprep.mubr.bf16.mxu0 0
    %160 = vmatmul.mubr.bf16.gmra.mrb[0].mxu0 %v115
    %v161 = vpop.f32.mrb[0].mxu0
    %v162 = vadd.f32 %v88, %v161
    %v163 = vpop.f32.mrb[0].mxu0
    %v164 = vadd.f32 %v92, %v163
    %v165 = vpop.f32.mrb[0].mxu0
    %v166 = vpop.f32.mrb[0].mxu0
    %167 = vdwg.mxu0
    %v168 = vmax.f32 %v162, 0.0
    %v169 = vmax.f32 %v164, 0.0
    %v170 = vpack.c.bf16 %v168, %v168
    %v171 = vpack.c.bf16 %v169, %v169
    %v172 = vld [vmem:[#allocation2] sm:$0xff]
    %v173 = vld [vmem:[#allocation2 + $0x8] sm:$0xf]
    %v174 = vld [vmem:[#allocation2 + $0xc] sm:$0xff]
    %v175 = vld [vmem:[#allocation2 + $0x14] sm:$0xf]
    %v176 = vld [vmem:[#allocation2 + $0x18] sm:$0xff]
    %v177 = vld [vmem:[#allocation2 + $0x20] sm:$0xf]
    %v178 = vld [vmem:[#allocation2 + $0x24] sm:$0xff]
    %v179 = vld [vmem:[#allocation2 + $0x2c] sm:$0xf]
    %v180 = vld [vmem:[#allocation2 + $0x30] sm:$0xff]
    %v181 = vld [vmem:[#allocation2 + $0x38] sm:$0xf]
    %v182 = vld [vmem:[#allocation2 + $0x3c] sm:$0xff]
    %v183 = vld [vmem:[#allocation2 + $0x44] sm:$0xf]
    %v184 = vld [vmem:[#allocation2 + $0x48] sm:$0xff]
    %v185 = vld [vmem:[#allocation2 + $0x50] sm:$0xf]
    %v186 = vld [vmem:[#allocation2 + $0x54] sm:$0xff]
    %v187 = vld [vmem:[#allocation2 + $0x5c] sm:$0xf]
    %v188 = vld [vmem:[#allocation2 + $0x60] sm:$0xff]
    %v189 = vld [vmem:[#allocation2 + $0x68] sm:$0xf]
    %v190 = vld [vmem:[#allocation2 + $0x6c] sm:$0xff]
    %v191 = vld [vmem:[#allocation2 + $0x74] sm:$0xf]
    %v192 = vld [vmem:[#allocation2 + $0x78] sm:$0xff]
    %v193 = vld [vmem:[#allocation2 + $0x80] sm:$0xf]
    %v194 = vld [vmem:[#allocation2 + $0x84] sm:$0xff]
    %v195 = vld [vmem:[#allocation2 + $0x8c] sm:$0xf]
    %v196 = vld [vmem:[#allocation2 + $0x90] sm:$0xff]
    %v197 = vld [vmem:[#allocation2 + $0x98] sm:$0xf]
    %v198 = vld [vmem:[#allocation2 + $0x9c] sm:$0xff]
    %v199 = vld [vmem:[#allocation2 + $0xa4] sm:$0xf]
    %v200 = vld [vmem:[#allocation2 + $0xa8] sm:$0xff]
    %v201 = vld [vmem:[#allocation2 + $0xb0] sm:$0xf]
    %v202 = vld [vmem:[#allocation2 + $0xb4] sm:$0xff]
    %v203 = vld [vmem:[#allocation2 + $0xbc] sm:$0xf]
    %v204 = vld [vmem:[#allocation2 + $0xc0] sm:$0xff]
    %v205 = vld [vmem:[#allocation2 + $0xc8] sm:$0xf]
    %v206 = vld [vmem:[#allocation2 + $0xcc] sm:$0xff]
    %v207 = vld [vmem:[#allocation2 + $0xd4] sm:$0xf]
    %v208 = vld [vmem:[#allocation2 + $0xd8] sm:$0xff]
    %v209 = vld [vmem:[#allocation2 + $0xe0] sm:$0xf]
    %v210 = vld [vmem:[#allocation2 + $0xe4] sm:$0xff]
    %v211 = vld [vmem:[#allocation2 + $0xec] sm:$0xf]
    %v212 = vld [vmem:[#allocation2 + $0xf0] sm:$0xff]
    %v213 = vld [vmem:[#allocation2 + $0xf8] sm:$0xf]
    %v214 = vld [vmem:[#allocation2 + $0xfc] sm:$0xff]
    %v215 = vld [vmem:[#allocation2 + $0x104] sm:$0xf]
    %v216 = vld [vmem:[#allocation2 + $0x108] sm:$0xff]
    %v217 = vld [vmem:[#allocation2 + $0x110] sm:$0xf]
    %v218 = vld [vmem:[#allocation2 + $0x114] sm:$0xff]
    %v219 = vld [vmem:[#allocation2 + $0x11c] sm:$0xf]
    %v220 = vld [vmem:[#allocation2 + $0x120] sm:$0xff]
    %v221 = vld [vmem:[#allocation2 + $0x128] sm:$0xf]
    %v222 = vld [vmem:[#allocation2 + $0x12c] sm:$0xff]
    %v223 = vld [vmem:[#allocation2 + $0x134] sm:$0xf]
    %v224 = vld [vmem:[#allocation2 + $0x138] sm:$0xff]
    %v225 = vld [vmem:[#allocation2 + $0x140] sm:$0xf]
    %v226 = vld [vmem:[#allocation2 + $0x144] sm:$0xff]
    %v227 = vld [vmem:[#allocation2 + $0x14c] sm:$0xf]
    %v228 = vld [vmem:[#allocation2 + $0x150] sm:$0xff]
    %v229 = vld [vmem:[#allocation2 + $0x158] sm:$0xf]
    %v230 = vld [vmem:[#allocation2 + $0x15c] sm:$0xff]
    %v231 = vld [vmem:[#allocation2 + $0x164] sm:$0xf]
    %v232 = vld [vmem:[#allocation2 + $0x168] sm:$0xff]
    %v233 = vld [vmem:[#allocation2 + $0x170] sm:$0xf]
    %v234 = vld [vmem:[#allocation2 + $0x174] sm:$0xff]
    %v235 = vld [vmem:[#allocation2 + $0x17c] sm:$0xf]
    %v236 = vld [vmem:[#allocation4] sm:$0x7]
    %v238 = vlaneseq
    %v239 = vshrl.u32 %v238, 7
    %v240 = vsub.s32 0, %v239
    %v241 = vrot.slane %v236, %v240
    %v242 = vlaneseq
    %v243 = vshrl.u32 %v242, 7
    %v244 = vsub.s32 1, %v243
    %v245 = vrot.slane %v236, %v244
    %v246 = vlaneseq
    %v247 = vshrl.u32 %v246, 7
    %v248 = vsub.s32 2, %v247
    %v249 = vrot.slane %v236, %v248
    %v317 = vunpack.c.l.b16 %v172
    %v318 = vunpack.c.h.b16 %v172
    %v319 = vunpack.c.l.b16 %v173
    %v320 = vunpack.c.l.b16 %v174
    %v321 = vunpack.c.h.b16 %v174
    %v322 = vunpack.c.l.b16 %v175
    %v323 = vunpack.c.l.b16 %v176
    %v324 = vunpack.c.h.b16 %v176
    %v325 = vunpack.c.l.b16 %v177
    %v326 = vunpack.c.l.b16 %v178
    %v327 = vunpack.c.h.b16 %v178
    %v328 = vunpack.c.l.b16 %v179
    %v329 = vunpack.c.l.b16 %v180
    %v330 = vunpack.c.h.b16 %v180
    %v331 = vunpack.c.l.b16 %v181
    %v332 = vunpack.c.l.b16 %v182
    %v333 = vunpack.c.h.b16 %v182
    %v334 = vunpack.c.l.b16 %v183
    %v335 = vunpack.c.l.b16 %v184
    %v336 = vunpack.c.h.b16 %v184
    %v337 = vunpack.c.l.b16 %v185
    %v338 = vunpack.c.l.b16 %v186
    %v339 = vunpack.c.h.b16 %v186
    %v340 = vunpack.c.l.b16 %v187
    %v341 = vunpack.c.l.b16 %v188
    %v342 = vunpack.c.h.b16 %v188
    %v343 = vunpack.c.l.b16 %v189
    %v344 = vunpack.c.l.b16 %v190
    %v345 = vunpack.c.h.b16 %v190
    %v346 = vunpack.c.l.b16 %v191
    %v347 = vunpack.c.l.b16 %v192
    %v348 = vunpack.c.h.b16 %v192
    %v349 = vunpack.c.l.b16 %v193
    %v350 = vunpack.c.l.b16 %v194
    %v351 = vunpack.c.h.b16 %v194
    %v352 = vunpack.c.l.b16 %v195
    %v353 = vunpack.c.l.b16 %v196
    %v354 = vunpack.c.h.b16 %v196
    %v355 = vunpack.c.l.b16 %v197
    %v356 = vunpack.c.l.b16 %v198
    %v357 = vunpack.c.h.b16 %v198
    %v358 = vunpack.c.l.b16 %v199
    %v359 = vunpack.c.l.b16 %v200
    %v360 = vunpack.c.h.b16 %v200
    %v361 = vunpack.c.l.b16 %v201
    %v362 = vunpack.c.l.b16 %v202
    %v363 = vunpack.c.h.b16 %v202
    %v364 = vunpack.c.l.b16 %v203
    %v365 = vunpack.c.l.b16 %v204
    %v366 = vunpack.c.h.b16 %v204
    %v367 = vunpack.c.l.b16 %v205
    %v368 = vunpack.c.l.b16 %v206
    %v369 = vunpack.c.h.b16 %v206
    %v370 = vunpack.c.l.b16 %v207
    %v371 = vunpack.c.l.b16 %v208
    %v372 = vunpack.c.h.b16 %v208
    %v373 = vunpack.c.l.b16 %v209
    %v374 = vunpack.c.l.b16 %v210
    %v375 = vunpack.c.h.b16 %v210
    %v376 = vunpack.c.l.b16 %v211
    %v377 = vunpack.c.l.b16 %v212
    %v378 = vunpack.c.h.b16 %v212
    %v379 = vunpack.c.l.b16 %v213
    %v380 = vunpack.c.l.b16 %v214
    %v381 = vunpack.c.h.b16 %v214
    %v382 = vunpack.c.l.b16 %v215
    %v383 = vunpack.c.l.b16 %v216
    %v384 = vunpack.c.h.b16 %v216
    %v385 = vunpack.c.l.b16 %v217
    %v386 = vunpack.c.l.b16 %v218
    %v387 = vunpack.c.h.b16 %v218
    %v388 = vunpack.c.l.b16 %v219
    %v389 = vunpack.c.l.b16 %v220
    %v390 = vunpack.c.h.b16 %v220
    %v391 = vunpack.c.l.b16 %v221
    %v392 = vunpack.c.l.b16 %v222
    %v393 = vunpack.c.h.b16 %v222
    %v394 = vunpack.c.l.b16 %v223
    %v395 = vunpack.c.l.b16 %v224
    %v396 = vunpack.c.h.b16 %v224
    %v397 = vunpack.c.l.b16 %v225
    %v398 = vunpack.c.l.b16 %v226
    %v399 = vunpack.c.h.b16 %v226
    %v400 = vunpack.c.l.b16 %v227
    %v401 = vunpack.c.l.b16 %v228
    %v402 = vunpack.c.h.b16 %v228
    %v403 = vunpack.c.l.b16 %v229
    %v404 = vunpack.c.l.b16 %v230
    %v405 = vunpack.c.h.b16 %v230
    %v406 = vunpack.c.l.b16 %v231
    %v407 = vunpack.c.l.b16 %v232
    %v408 = vunpack.c.h.b16 %v232
    %v409 = vunpack.c.l.b16 %v233
    %v410 = vunpack.c.l.b16 %v234
    %v411 = vunpack.c.h.b16 %v234
    %v412 = vunpack.c.l.b16 %v235
    %v413 = vpack.c.b16 %v320, %v317
    %v414 = vpack.c.b16 %v321, %v318
    %v415 = vpack.c.b16 %v322, %v319
    %v416 = vpack.c.b16 %v326, %v323
    %v417 = vpack.c.b16 %v327, %v324
    %v418 = vpack.c.b16 %v328, %v325
    %v419 = vpack.c.b16 %v332, %v329
    %v420 = vpack.c.b16 %v333, %v330
    %v421 = vpack.c.b16 %v334, %v331
    %v422 = vpack.c.b16 %v338, %v335
    %v423 = vpack.c.b16 %v339, %v336
    %v424 = vpack.c.b16 %v340, %v337
    %v425 = vpack.c.b16 %v344, %v341
    %v426 = vpack.c.b16 %v345, %v342
    %v427 = vpack.c.b16 %v346, %v343
    %v428 = vpack.c.b16 %v350, %v347
    %v429 = vpack.c.b16 %v351, %v348
    %v430 = vpack.c.b16 %v352, %v349
    %v431 = vpack.c.b16 %v356, %v353
    %v432 = vpack.c.b16 %v357, %v354
    %v433 = vpack.c.b16 %v358, %v355
    %v434 = vpack.c.b16 %v362, %v359
    %v435 = vpack.c.b16 %v363, %v360
    %v436 = vpack.c.b16 %v364, %v361
    %v437 = vpack.c.b16 %v368, %v365
    %v438 = vpack.c.b16 %v369, %v366
    %v439 = vpack.c.b16 %v370, %v367
    %v440 = vpack.c.b16 %v374, %v371
    %v441 = vpack.c.b16 %v375, %v372
    %v442 = vpack.c.b16 %v376, %v373
    %v443 = vpack.c.b16 %v380, %v377
    %v444 = vpack.c.b16 %v381, %v378
    %v445 = vpack.c.b16 %v382, %v379
    %v446 = vpack.c.b16 %v386, %v383
    %v447 = vpack.c.b16 %v387, %v384
    %v448 = vpack.c.b16 %v388, %v385
    %v449 = vpack.c.b16 %v392, %v389
    %v450 = vpack.c.b16 %v393, %v390
    %v451 = vpack.c.b16 %v394, %v391
    %v452 = vpack.c.b16 %v398, %v395
    %v453 = vpack.c.b16 %v399, %v396
    %v454 = vpack.c.b16 %v400, %v397
    %v455 = vpack.c.b16 %v404, %v401
    %v456 = vpack.c.b16 %v405, %v402
    %v457 = vpack.c.b16 %v406, %v403
    %v458 = vpack.c.b16 %v410, %v407
    %v459 = vpack.c.b16 %v411, %v408
    %v460 = vpack.c.b16 %v412, %v409
    %509 = vmatprep.subr.bf16.mxu0 %v414
    %510 = vmatpush1.bf16.msra.mxu0 %v413
    %511 = vmatprep.subr.bf16.mxu0 %v417
    %512 = vmatpush1.bf16.msra.mxu0 %v416
    %513 = vmatprep.subr.bf16.mxu0 %v420
    %514 = vmatpush1.bf16.msra.mxu0 %v419
    %515 = vmatprep.subr.bf16.mxu0 %v423
    %516 = vmatpush1.bf16.msra.mxu0 %v422
    %517 = vmatprep.subr.bf16.mxu0 %v426
    %518 = vmatpush1.bf16.msra.mxu0 %v425
    %519 = vmatprep.subr.bf16.mxu0 %v429
    %520 = vmatpush1.bf16.msra.mxu0 %v428
    %521 = vmatprep.subr.bf16.mxu0 %v432
    %522 = vmatpush1.bf16.msra.mxu0 %v431
    %523 = vmatprep.subr.bf16.mxu0 %v435
    %524 = vmatpush1.bf16.msra.mxu0 %v434
    %525 = vmatprep.subr.bf16.mxu0 %v438
    %526 = vmatpush1.bf16.msra.mxu0 %v437
    %527 = vmatprep.subr.bf16.mxu0 %v441
    %528 = vmatpush1.bf16.msra.mxu0 %v440
    %529 = vmatprep.subr.bf16.mxu0 %v444
    %530 = vmatpush1.bf16.msra.mxu0 %v443
    %531 = vmatprep.subr.bf16.mxu0 %v447
    %532 = vmatpush1.bf16.msra.mxu0 %v446
    %533 = vmatprep.subr.bf16.mxu0 %v450
    %534 = vmatpush1.bf16.msra.mxu0 %v449
    %535 = vmatprep.subr.bf16.mxu0 %v453
    %536 = vmatpush1.bf16.msra.mxu0 %v452
    %537 = vmatprep.subr.bf16.mxu0 %v456
    %538 = vmatpush1.bf16.msra.mxu0 %v455
    %539 = vmatprep.subr.bf16.mxu0 %v459
    %540 = vmatpush1.bf16.msra.mxu0 %v458
    %541 = vmatprep.mubr.bf16.mxu0 %v171
    %542 = vmatmul.mubr.bf16.gmra.mrb[0].mxu0 %v170
    %v543 = vpop.f32.mrb[0].mxu0
    %v544 = vadd.f32 %v241, %v543
    %v545 = vpop.f32.mrb[0].mxu0
    %v546 = vadd.f32 %v245, %v545
    %v547 = vpop.f32.mrb[0].mxu0
    %v548 = vpop.f32.mrb[0].mxu0
    %549 = vdwg.mxu0
    %550 = vmatprep.subr.bf16.mxu0 0
    %551 = vmatpush1.bf16.msra.mxu0 %v415
    %552 = vmatprep.subr.bf16.mxu0 0
    %553 = vmatpush1.bf16.msra.mxu0 %v418
    %554 = vmatprep.subr.bf16.mxu0 0
    %555 = vmatpush1.bf16.msra.mxu0 %v421
    %556 = vmatprep.subr.bf16.mxu0 0
    %557 = vmatpush1.bf16.msra.mxu0 %v424
    %558 = vmatprep.subr.bf16.mxu0 0
    %559 = vmatpush1.bf16.msra.mxu0 %v427
    %560 = vmatprep.subr.bf16.mxu0 0
    %561 = vmatpush1.bf16.msra.mxu0 %v430
    %562 = vmatprep.subr.bf16.mxu0 0
    %563 = vmatpush1.bf16.msra.mxu0 %v433
    %564 = vmatprep.subr.bf16.mxu0 0
    %565 = vmatpush1.bf16.msra.mxu0 %v436
    %566 = vmatprep.subr.bf16.mxu0 0
    %567 = vmatpush1.bf16.msra.mxu0 %v439
    %568 = vmatprep.subr.bf16.mxu0 0
    %569 = vmatpush1.bf16.msra.mxu0 %v442
    %570 = vmatprep.subr.bf16.mxu0 0
    %571 = vmatpush1.bf16.msra.mxu0 %v445
    %572 = vmatprep.subr.bf16.mxu0 0
    %573 = vmatpush1.bf16.msra.mxu0 %v448
    %574 = vmatprep.subr.bf16.mxu0 0
    %575 = vmatpush1.bf16.msra.mxu0 %v451
    %576 = vmatprep.subr.bf16.mxu0 0
    %577 = vmatpush1.bf16.msra.mxu0 %v454
    %578 = vmatprep.subr.bf16.mxu0 0
    %579 = vmatpush1.bf16.msra.mxu0 %v457
    %580 = vmatprep.subr.bf16.mxu0 0
    %581 = vmatpush1.bf16.msra.mxu0 %v460
    %582 = vmatprep.mubr.bf16.mxu0 %v171
    %583 = vmatmul.mubr.bf16.gmra.mrb[0].mxu0 %v170
    %v584 = vpop.f32.mrb[0].mxu0
    %v585 = vadd.f32 %v249, %v584
    %v586 = vpop.f32.mrb[0].mxu0
    %v587 = vpop.f32.mrb[0].mxu0
    %v588 = vpop.f32.mrb[0].mxu0
    %589 = vdwg.mxu0
    %v590 = vmax.f32 %v544, 0.0
    %v591 = vmax.f32 %v546, 0.0
    %v592 = vmax.f32 %v585, 0.0
    %v593 = vpack.c.bf16 %v590, %v590
    %v594 = vpack.c.bf16 %v591, %v591
    %v595 = vpack.c.bf16 %v592, %v592
    %v596 = vld [vmem:[#allocation6] sm:$0xf]
    %v597 = vld [vmem:[#allocation6 + $0x4] sm:$0xf]
    %v598 = vld [vmem:[#allocation6 + $0x8] sm:$0xf]
    %v599 = vld [vmem:[#allocation6 + $0xc] sm:$0xf]
    %v600 = vld [vmem:[#allocation6 + $0x10] sm:$0xf]
    %v601 = vld [vmem:[#allocation6 + $0x14] sm:$0xf]
    %v602 = vld [vmem:[#allocation6 + $0x18] sm:$0xf]
    %v603 = vld [vmem:[#allocation6 + $0x1c] sm:$0xf]
    %v604 = vld [vmem:[#allocation6 + $0x20] sm:$0xf]
    %v605 = vld [vmem:[#allocation6 + $0x24] sm:$0xf]
    %v606 = vld [vmem:[#allocation6 + $0x28] sm:$0xf]
    %v607 = vld [vmem:[#allocation6 + $0x2c] sm:$0xf]
    %v608 = vld [vmem:[#allocation6 + $0x30] sm:$0xf]
    %v609 = vld [vmem:[#allocation6 + $0x34] sm:$0xf]
    %v610 = vld [vmem:[#allocation6 + $0x38] sm:$0xf]
    %v611 = vld [vmem:[#allocation6 + $0x3c] sm:$0xf]
    %v612 = vld [vmem:[#allocation6 + $0x40] sm:$0xf]
    %v613 = vld [vmem:[#allocation6 + $0x44] sm:$0xf]
    %v614 = vld [vmem:[#allocation6 + $0x48] sm:$0xf]
    %v615 = vld [vmem:[#allocation6 + $0x4c] sm:$0xf]
    %v616 = vld [vmem:[#allocation6 + $0x50] sm:$0xf]
    %v617 = vld [vmem:[#allocation6 + $0x54] sm:$0xf]
    %v618 = vld [vmem:[#allocation6 + $0x58] sm:$0xf]
    %v619 = vld [vmem:[#allocation6 + $0x5c] sm:$0xf]
    %v620 = vld [vmem:[#allocation6 + $0x60] sm:$0xf]
    %v621 = vld [vmem:[#allocation6 + $0x64] sm:$0xf]
    %v622 = vld [vmem:[#allocation6 + $0x68] sm:$0xf]
    %v623 = vld [vmem:[#allocation6 + $0x6c] sm:$0xf]
    %v624 = vld [vmem:[#allocation6 + $0x70] sm:$0xf]
    %v625 = vld [vmem:[#allocation6 + $0x74] sm:$0xf]
    %v626 = vld [vmem:[#allocation6 + $0x78] sm:$0xf]
    %v627 = vld [vmem:[#allocation6 + $0x7c] sm:$0xf]
    %v628 = vld [vmem:[#allocation6 + $0x80] sm:$0xf]
    %v629 = vld [vmem:[#allocation6 + $0x84] sm:$0xf]
    %v630 = vld [vmem:[#allocation6 + $0x88] sm:$0xf]
    %v631 = vld [vmem:[#allocation6 + $0x8c] sm:$0xf]
    %v632 = vld [vmem:[#allocation6 + $0x90] sm:$0xf]
    %v633 = vld [vmem:[#allocation6 + $0x94] sm:$0xf]
    %v634 = vld [vmem:[#allocation6 + $0x98] sm:$0xf]
    %v635 = vld [vmem:[#allocation6 + $0x9c] sm:$0xf]
    %v636 = vld [vmem:[#allocation6 + $0xa0] sm:$0xf]
    %v637 = vld [vmem:[#allocation6 + $0xa4] sm:$0xf]
    %v638 = vld [vmem:[#allocation6 + $0xa8] sm:$0xf]
    %v639 = vld [vmem:[#allocation6 + $0xac] sm:$0xf]
    %v640 = vld [vmem:[#allocation6 + $0xb0] sm:$0xf]
    %v641 = vld [vmem:[#allocation6 + $0xb4] sm:$0xf]
    %v642 = vld [vmem:[#allocation6 + $0xb8] sm:$0xf]
    %v643 = vld [vmem:[#allocation6 + $0xbc] sm:$0xf]
    %v644 = vld [vmem:[#allocation7] sm:$0x1]
    %v646 = vlaneseq
    %v647 = vshrl.u32 %v646, 7
    %v648 = vsub.s32 0, %v647
    %v649 = vrot.slane %v644, %v648
    %v699 = vunpack.c.l.b16 %v596
    %v700 = vunpack.c.l.b16 %v597
    %v701 = vunpack.c.l.b16 %v598
    %v702 = vunpack.c.l.b16 %v599
    %v703 = vunpack.c.l.b16 %v600
    %v704 = vunpack.c.l.b16 %v601
    %v705 = vunpack.c.l.b16 %v602
    %v706 = vunpack.c.l.b16 %v603
    %v707 = vunpack.c.l.b16 %v604
    %v708 = vunpack.c.l.b16 %v605
    %v709 = vunpack.c.l.b16 %v606
    %v710 = vunpack.c.l.b16 %v607
    %v711 = vunpack.c.l.b16 %v608
    %v712 = vunpack.c.l.b16 %v609
    %v713 = vunpack.c.l.b16 %v610
    %v714 = vunpack.c.l.b16 %v611
    %v715 = vunpack.c.l.b16 %v612
    %v716 = vunpack.c.l.b16 %v613
    %v717 = vunpack.c.l.b16 %v614
    %v718 = vunpack.c.l.b16 %v615
    %v719 = vunpack.c.l.b16 %v616
    %v720 = vunpack.c.l.b16 %v617
    %v721 = vunpack.c.l.b16 %v618
    %v722 = vunpack.c.l.b16 %v619
    %v723 = vunpack.c.l.b16 %v620
    %v724 = vunpack.c.l.b16 %v621
    %v725 = vunpack.c.l.b16 %v622
    %v726 = vunpack.c.l.b16 %v623
    %v727 = vunpack.c.l.b16 %v624
    %v728 = vunpack.c.l.b16 %v625
    %v729 = vunpack.c.l.b16 %v626
    %v730 = vunpack.c.l.b16 %v627
    %v731 = vunpack.c.l.b16 %v628
    %v732 = vunpack.c.l.b16 %v629
    %v733 = vunpack.c.l.b16 %v630
    %v734 = vunpack.c.l.b16 %v631
    %v735 = vunpack.c.l.b16 %v632
    %v736 = vunpack.c.l.b16 %v633
    %v737 = vunpack.c.l.b16 %v634
    %v738 = vunpack.c.l.b16 %v635
    %v739 = vunpack.c.l.b16 %v636
    %v740 = vunpack.c.l.b16 %v637
    %v741 = vunpack.c.l.b16 %v638
    %v742 = vunpack.c.l.b16 %v639
    %v743 = vunpack.c.l.b16 %v640
    %v744 = vunpack.c.l.b16 %v641
    %v745 = vunpack.c.l.b16 %v642
    %v746 = vunpack.c.l.b16 %v643
    %v747 = vpack.c.b16 %v700, %v699
    %v748 = vpack.c.b16 %v702, %v701
    %v749 = vpack.c.b16 %v704, %v703
    %v750 = vpack.c.b16 %v706, %v705
    %v751 = vpack.c.b16 %v708, %v707
    %v752 = vpack.c.b16 %v710, %v709
    %v753 = vpack.c.b16 %v712, %v711
    %v754 = vpack.c.b16 %v714, %v713
    %v755 = vpack.c.b16 %v716, %v715
    %v756 = vpack.c.b16 %v718, %v717
    %v757 = vpack.c.b16 %v720, %v719
    %v758 = vpack.c.b16 %v722, %v721
    %v759 = vpack.c.b16 %v724, %v723
    %v760 = vpack.c.b16 %v726, %v725
    %v761 = vpack.c.b16 %v728, %v727
    %v762 = vpack.c.b16 %v730, %v729
    %v763 = vpack.c.b16 %v732, %v731
    %v764 = vpack.c.b16 %v734, %v733
    %v765 = vpack.c.b16 %v736, %v735
    %v766 = vpack.c.b16 %v738, %v737
    %v767 = vpack.c.b16 %v740, %v739
    %v768 = vpack.c.b16 %v742, %v741
    %v769 = vpack.c.b16 %v744, %v743
    %v770 = vpack.c.b16 %v746, %v745
    %795 = vmatprep.subr.bf16.mxu0 0
    %796 = vmatpush1.bf16.msra.mxu0 %v747
    %797 = vmatprep.subr.bf16.mxu0 0
    %798 = vmatpush1.bf16.msra.mxu0 %v748
    %799 = vmatprep.subr.bf16.mxu0 0
    %800 = vmatpush1.bf16.msra.mxu0 %v749
    %801 = vmatprep.subr.bf16.mxu0 0
    %802 = vmatpush1.bf16.msra.mxu0 %v750
    %803 = vmatprep.subr.bf16.mxu0 0
    %804 = vmatpush1.bf16.msra.mxu0 %v751
    %805 = vmatprep.subr.bf16.mxu0 0
    %806 = vmatpush1.bf16.msra.mxu0 %v752
    %807 = vmatprep.subr.bf16.mxu0 0
    %808 = vmatpush1.bf16.msra.mxu0 %v753
    %809 = vmatprep.subr.bf16.mxu0 0
    %810 = vmatpush1.bf16.msra.mxu0 %v754
    %811 = vmatprep.subr.bf16.mxu0 0
    %812 = vmatpush1.bf16.msra.mxu0 %v755
    %813 = vmatprep.subr.bf16.mxu0 0
    %814 = vmatpush1.bf16.msra.mxu0 %v756
    %815 = vmatprep.subr.bf16.mxu0 0
    %816 = vmatpush1.bf16.msra.mxu0 %v757
    %817 = vmatprep.subr.bf16.mxu0 0
    %818 = vmatpush1.bf16.msra.mxu0 %v758
    %819 = vmatprep.subr.bf16.mxu0 0
    %820 = vmatpush1.bf16.msra.mxu0 %v759
    %821 = vmatprep.subr.bf16.mxu0 0
    %822 = vmatpush1.bf16.msra.mxu0 %v760
    %823 = vmatprep.subr.bf16.mxu0 0
    %824 = vmatpush1.bf16.msra.mxu0 %v761
    %825 = vmatprep.subr.bf16.mxu0 0
    %826 = vmatpush1.bf16.msra.mxu0 %v762
    %827 = vmatprep.mubr.bf16.mxu0 %v594
    %828 = vmatmul.mubr.bf16.gmra.mrb[0].mxu0 %v593
    %v829 = vpop.f32.mrb[0].mxu0
    %v830 = vadd.f32 %v649, %v829
    %v831 = vpop.f32.mrb[0].mxu0
    %v832 = vpop.f32.mrb[0].mxu0
    %v833 = vpop.f32.mrb[0].mxu0
    %834 = vdwg.mxu0
    %835 = vmatprep.subr.bf16.mxu0 0
    %836 = vmatpush1.bf16.msra.mxu0 %v763
    %837 = vmatprep.subr.bf16.mxu0 0
    %838 = vmatpush1.bf16.msra.mxu0 %v764
    %839 = vmatprep.subr.bf16.mxu0 0
    %840 = vmatpush1.bf16.msra.mxu0 %v765
    %841 = vmatprep.subr.bf16.mxu0 0
    %842 = vmatpush1.bf16.msra.mxu0 %v766
    %843 = vmatprep.subr.bf16.mxu0 0
    %844 = vmatpush1.bf16.msra.mxu0 %v767
    %845 = vmatprep.subr.bf16.mxu0 0
    %846 = vmatpush1.bf16.msra.mxu0 %v768
    %847 = vmatprep.subr.bf16.mxu0 0
    %848 = vmatpush1.bf16.msra.mxu0 %v769
    %849 = vmatprep.subr.bf16.mxu0 0
    %850 = vmatpush1.bf16.msra.mxu0 %v770
    %851 = vmatprep.subr.bf16.mxu0 0
    %852 = vmatpush1.bf16.msra.mxu0 0
    %853 = vmatprep.subr.bf16.mxu0 0
    %854 = vmatpush1.bf16.msra.mxu0 0
    %855 = vmatprep.subr.bf16.mxu0 0
    %856 = vmatpush1.bf16.msra.mxu0 0
    %857 = vmatprep.subr.bf16.mxu0 0
    %858 = vmatpush1.bf16.msra.mxu0 0
    %859 = vmatprep.subr.bf16.mxu0 0
    %860 = vmatpush1.bf16.msra.mxu0 0
    %861 = vmatprep.subr.bf16.mxu0 0
    %862 = vmatpush1.bf16.msra.mxu0 0
    %863 = vmatprep.subr.bf16.mxu0 0
    %864 = vmatpush1.bf16.msra.mxu0 0
    %865 = vmatprep.subr.bf16.mxu0 0
    %866 = vmatpush1.bf16.msra.mxu0 0
    %867 = vmatprep.mubr.bf16.mxu0 0
    %868 = vmatmul.mubr.bf16.gmra.mrb[0].mxu0 %v595
    %v869 = vpop.f32.mrb[0].mxu0
    %v870 = vadd.f32 %v830, %v869
    %v871 = vpop.f32.mrb[0].mxu0
    %v872 = vpop.f32.mrb[0].mxu0
    %v873 = vpop.f32.mrb[0].mxu0
    %874 = vdwg.mxu0
    %v875 = vlaneseq
    %v876 = vand.u32 %v875, 127
    %vm877 = vcmp.eq.s32.totalorder %v876, 2
    %v878 = vxor.u32 %v870, 2147483648
    %v879 = vmul.f32 %v878, 1.442695
    %v880 = vpow.pop %v879
    %v881 = vadd.f32 %v880, 1.0
    %v882 = vrcp.pop %v881
    %v883 = vmul.f32 1.0, %v882
    %v884 = vsel %vm877, %v883, %v870
    %v885 = vpack.c.bf16 %v884, %v884
    %886 = vst [vmem:[%s7] sm:$0xf] %v885
    // Predicated region
    $region46: #{hypersnet_forward.1} parent=1 // pred_check
      _
    $region47: #{hypersnet_forward.1} parent=1 // pred_check_branch
      %888 = sbr.rel (0) target = $region49
    $region48: #{hypersnet_forward.1} parent=1 // pred_region
      _
    $region49: #{hypersnet_forward.1} parent=1 // pred_fallthru
      _
    // Predicated region
    $region50: #{hypersnet_forward.1} parent=1 // pred_check
      _
    $region51: #{hypersnet_forward.1} parent=1 // pred_check_branch
      %890 = sbr.rel (0) target = $region53
    $region52: #{hypersnet_forward.1} parent=1 // pred_region
      _
    $region53: #{hypersnet_forward.1} parent=1 // pred_fallthru
      _
    %891 = vsyncpa [#allocation3], 1
    %892 = vsyncpa [#allocation5], 1
    %893 = vsyncpa [#allocation8], 1

</llo_original>
